<compile_context>
chip_gen: v7x
topology: tpu7x:2x2x1
jax: 0.10.0
libtpu: 0.0.40
codegen_flags: <defaults>
</compile_context>

<pallas_src>
import math
import functools

import jax
import jax.numpy as jnp
from jax.experimental import pallas as pl
from jax.experimental.pallas import tpu as pltpu


def _build_pe_table(max_len: int, d_model: int) -> jnp.ndarray:
    """Deterministic sinusoidal table, identical to the PyTorch __init__."""
    # The PyTorch 0::2 / 1::2 assignment only works for even d_model.
    assert d_model % 2 == 0, "PositionalEncoding requires an even d_model"
    position = jnp.arange(max_len, dtype=jnp.float32)[:, None]                 # (L, 1)
    div_term = jnp.exp(
        jnp.arange(0, d_model, 2, dtype=jnp.float32) * (-math.log(10000.0) / d_model)
    )                                                                          # (D/2,)
    ang = position * div_term                                                  # (L, D/2)
    # pe[:, 0::2] = sin, pe[:, 1::2] = cos  ->  interleave on the last axis
    pe = jnp.stack([jnp.sin(ang), jnp.cos(ang)], axis=-1).reshape(max_len, d_model)
    return pe                                                                  # (L, D)


def _cdiv(a: int, b: int) -> int:
    return -(-a // b)


def _round_up(a: int, m: int) -> int:
    return _cdiv(a, m) * m


def _device_kind() -> str:
    try:
        return jax.devices()[0].device_kind.lower()
    except Exception:
        return ""


def _is_v7() -> bool:
    k = _device_kind()
    return ("v7" in k) or ("7x" in k)


def _tile_budget_bytes() -> int:
    # v7x: 64 MiB VMEM/TC -> keep per-block size modest so 2xin + 2xout + PE
    # buffers stay well under ~48 MiB.  v5e/v6e: 128 MiB VMEM -> go bigger to
    # amortize the ~0.35 us per-grid-step overhead (roofline measurements show
    # 512-1024-wide blocks reach 85%+ of HBM BW vs ~63% at 256).
    return (6 << 20) if _is_v7() else (12 << 20)


def _vmem_limit_bytes() -> int:
    return (48 << 20) if _is_v7() else (64 << 20)


def _small_input_threshold_bytes() -> int:
    # Below this, pallas_call launch + pipeline prologue dominates; let XLA
    # fuse the add instead.  Higher on v7x (3.2 TB/s HBM).
    return (4 << 20) if _is_v7() else (2 << 20)


def _plan_tiles(S: int, B: int, D: int, itemsize: int, budget_bytes: int):
    """Pick (seq_tile, b_tile, pack) for the lane-dense (S, B*D) layout."""
    # Dtype-aware sublane packing: 8 rows for 32-bit, 16 for 16-bit, 32 for 8-bit.
    pack = max(8, 32 // max(1, itemsize))

    # Batch (lane-axis) tile: largest divisor of B whose single packed-row
    # group fits the per-block budget.  Common path: b_tile == B (full width).
    b_tile = 1
    for d in range(B, 0, -1):
        if B % d == 0 and pack * d * D * itemsize <= budget_bytes:
            b_tile = d
            break

    row_bytes = b_tile * D * itemsize
    seq_tile = max(pack, (budget_bytes // row_bytes) // pack * pack)
    seq_tile = min(seq_tile, _round_up(S, pack))

    # Prefer >= 4 grid steps (double-buffer overlap + balanced megacore split
    # on v7x) whenever the sequence axis is long enough to split further.
    n_batch = B // b_tile
    if _cdiv(S, seq_tile) * n_batch < 4 and S > pack:
        target_steps = max(1, 4 // n_batch)
        seq_tile = max(pack, _round_up(_cdiv(S, target_steps), pack))

    return seq_tile, b_tile, pack


def _pe_add_kernel(x_ref, pe_ref, o_ref, *, reps: int):
    # x_ref : (seq_tile, b_tile*D)  lane-dense tile of the flattened input
    # pe_ref: (seq_tile, D)         per-step, pre-scaled PE tile
    # o_ref : (seq_tile, b_tile*D)
    pe = pe_ref[...]
    if reps > 1:
        # Replicate the D-wide PE row across the batch blocks packed along
        # lanes.  XLU/VPU filler, hidden under DMA in this mem-bound kernel.
        pe = jnp.tile(pe, (1, reps))
    o_ref[...] = x_ref[...] + pe


def positional_encoding(x: jnp.ndarray,
                        pe_table: jnp.ndarray,
                        offset: int = 0,
                        *,
                        use_kernel: bool | None = None,
                        donate_x: bool = False) -> jnp.ndarray:
    """x: (S, B, D), pe_table: (max_len, D) float32.  Returns x + pe/sqrt(D)."""
    S, B, D = x.shape
    max_len = pe_table.shape[0]
    if isinstance(offset, int):
        # jax.lax.dynamic_slice silently clamps; match PyTorch's hard failure
        # for static offsets.  (Traced offsets are clamped -- documented.)
        assert 0 <= offset and offset + S <= max_len, "offset out of range for pe table"

    # Bake the 1/sqrt(D) scale into the PE rows once (free at trace time).
    inv_sqrt_d = 1.0 / math.sqrt(D)
    pe_slice = (jax.lax.dynamic_slice(pe_table, (offset, 0), (S, D))
                * inv_sqrt_d).astype(x.dtype)                                  # (S, D)

    itemsize = jnp.dtype(x.dtype).itemsize
    if use_kernel is None:
        use_kernel = (x.size * itemsize) >= _small_input_threshold_bytes()
    if not use_kernel:
        return x + pe_slice[:, None, :]

    seq_tile, b_tile, pack = _plan_tiles(S, B, D, itemsize, _tile_budget_bytes())
    n_seq = _cdiv(S, seq_tile)
    n_batch = B // b_tile
    S_pad = n_seq * seq_tile
    W = B * D
    lane_tile = b_tile * D

    # Lane-dense 2D layout: (S, B, D) -> (S, B*D) is a free contiguous reshape.
    x2 = x.reshape(S, W)
    pe2 = pe_slice
    if S_pad != S:
        # Pad BOTH operands so the last block's PE DMA never reads OOB
        # (no runtime bounds check on VMEM refs).
        x2 = jnp.pad(x2, ((0, S_pad - S), (0, 0)))
        pe2 = jnp.pad(pe2, ((0, S_pad - S), (0, 0)))

    kernel = functools.partial(_pe_add_kernel, reps=b_tile)
    out2 = pl.pallas_call(
        kernel,
        out_shape=jax.ShapeDtypeStruct((S_pad, W), x.dtype),
        grid_spec=pltpu.PrefetchScalarGridSpec(
            num_scalar_prefetch=0,
            grid=(n_seq, n_batch),
            in_specs=[
                pl.BlockSpec((seq_tile, lane_tile), lambda i, j: (i, j)),
                # PE tiled per step with the same seq index_map as x; its DMA
                # is only 1/b_tile of the x tile and is fully pipelined.
                pl.BlockSpec((seq_tile, D), lambda i, j: (i, 0)),
            ],
            out_specs=pl.BlockSpec((seq_tile, lane_tile), lambda i, j: (i, j)),
        ),
        compiler_params=pltpu.CompilerParams(
            dimension_semantics=("parallel", "parallel"),
            vmem_limit_bytes=_vmem_limit_bytes(),
        ),
        input_output_aliases=({0: 0} if donate_x else {}),
    )(x2, pe2)

    if S_pad != S:
        out2 = out2[:S]
    return out2.reshape(S, B, D)


if __name__ == "__main__":
    key = jax.random.PRNGKey(0)

    # --- 1) Small single-block case: x is (seq, batch, d_model).
    S, B, D = 8, 2, 32
    MAX_LEN, OFFSET = 64, 3
    pe_table = _build_pe_table(MAX_LEN, D)
    x = jax.random.normal(key, (S, B, D), dtype=jnp.float32)
    out = jax.block_until_ready(positional_encoding(x, pe_table, offset=OFFSET, use_kernel=True))
    ref = x + pe_table[OFFSET:OFFSET + S][:, None, :] / math.sqrt(D)
    assert out.shape == (S, B, D)
    assert jnp.allclose(out, ref, atol=1e-6, rtol=1e-6)

    # --- 2) Multi-step seq grid (tiled seq axis) + offset.
    S2, B2, D2 = 64, 4, 128
    pe_table2 = _build_pe_table(128, D2)
    x2 = jax.random.normal(jax.random.PRNGKey(1), (S2, B2, D2), dtype=jnp.float32)
    out2 = jax.block_until_ready(positional_encoding(x2, pe_table2, offset=5, use_kernel=True))
    ref2 = x2 + pe_table2[5:5 + S2][:, None, :] / math.sqrt(D2)
    assert out2.shape == (S2, B2, D2)
    assert jnp.allclose(out2, ref2, atol=1e-6, rtol=1e-6)

    # --- 3) Non-multiple-of-8 seq length -> exercises the cdiv grid + padding path.
    S3, B3, D3 = 13, 2, 32
    pe_table3 = _build_pe_table(32, D3)
    x3 = jax.random.normal(jax.random.PRNGKey(2), (S3, B3, D3), dtype=jnp.float32)
    out3 = jax.block_until_ready(positional_encoding(x3, pe_table3, offset=7, use_kernel=True))
    ref3 = x3 + pe_table3[7:7 + S3][:, None, :] / math.sqrt(D3)
    assert out3.shape == (S3, B3, D3)
    assert jnp.allclose(out3, ref3, atol=1e-6, rtol=1e-6)

    # --- 4) bf16 input -> dtype-aware (16-row) sublane packing path.
    S4, B4, D4 = 32, 2, 128
    pe_table4 = _build_pe_table(64, D4)
    x4 = jax.random.normal(jax.random.PRNGKey(3), (S4, B4, D4), dtype=jnp.float32).astype(jnp.bfloat16)
    out4 = jax.block_until_ready(positional_encoding(x4, pe_table4, offset=0, use_kernel=True))
    ref4 = x4 + (pe_table4[:S4] / math.sqrt(D4)).astype(jnp.bfloat16)[:, None, :]
    assert out4.shape == (S4, B4, D4)
    assert jnp.allclose(out4.astype(jnp.float32), ref4.astype(jnp.float32), atol=2e-2, rtol=2e-2)

    print("KERNEL_OK")
</pallas_src>

<mosaic_0001>
module attributes {stable_mosaic.version = 11 : i64} {
  func.func @_pe_add_kernel(%arg0: i32, %arg1: i32, %arg2: memref<8x64xf32, #tpu.memory_space<vmem>>, %arg3: memref<8x32xf32, #tpu.memory_space<vmem>>, %arg4: memref<8x64xf32, #tpu.memory_space<vmem>>) attributes {dimension_semantics = [#tpu.dimension_semantics<parallel>, #tpu.dimension_semantics<parallel>], iteration_bounds = array<i64: 1, 1>, scalar_prefetch = 0 : i64, scratch_operands = 0 : i64, tpu.core_type = #tpu.core_type<tc>, window_params = [{transform_indices = @transform_0, window_bounds = array<i64: 8, 64>}, {transform_indices = @transform_1, window_bounds = array<i64: 8, 32>}, {transform_indices = @transform_2, window_bounds = array<i64: 8, 64>}]} {
    %c0 = arith.constant 0 : index
    %c0_0 = arith.constant 0 : index
    %0 = vector.load %arg3[%c0, %c0_0] : memref<8x32xf32, #tpu.memory_space<vmem>>, vector<8x32xf32>
    %1 = tpu.concatenate %0, %0 in 1 : vector<8x32xf32>, vector<8x32xf32> -> vector<8x64xf32>
    %c0_1 = arith.constant 0 : index
    %c0_2 = arith.constant 0 : index
    %2 = vector.load %arg2[%c0_1, %c0_2] : memref<8x64xf32, #tpu.memory_space<vmem>>, vector<8x64xf32>
    %3 = arith.addf %2, %1 : vector<8x64xf32>
    %c0_3 = arith.constant 0 : index
    %c0_4 = arith.constant 0 : index
    %4 = vector.load %arg4[%c0_3, %c0_4] : memref<8x64xf32, #tpu.memory_space<vmem>>, vector<8x64xf32>
    tpu.vector_store %arg4[%c0_3, %c0_4], %3 {strides = array<i32>} : memref<8x64xf32, #tpu.memory_space<vmem>>, vector<8x64xf32>,
    return
  }
  func.func @transform_0(%arg0: i32, %arg1: i32) -> (i32, i32) {
    %c0_i32 = arith.constant 0 : i32
    return %arg0, %arg1 : i32, i32
  }
  func.func @transform_1(%arg0: i32, %arg1: i32) -> (i32, i32) {
    %c0_i32 = arith.constant 0 : i32
    %c0_i32_0 = arith.constant 0 : i32
    return %arg0, %c0_i32 : i32, i32
  }
  func.func @transform_2(%arg0: i32, %arg1: i32) -> (i32, i32) {
    %c0_i32 = arith.constant 0 : i32
    return %arg0, %arg1 : i32, i32
  }
}

</mosaic_0001>

<llo_original>
// kernel: tpu_custom_call.1
$region0: #{tpu_custom_call.1}
  #allocation0 [shape = 'u32[]', space=smem, size = 0x4, offset = 0x4, fixed_abs, tag = 'smem constant byte address 0x4 - core index']
  #allocation1 [shape = 'u32[144,128]{1,0:T(1,128)}', space=vmem, size = 0x12000, scoped, tag = 'internal scratch']
  %s0 = inlined_call_operand.hbm [shape: f32[8,64], index: 0, kind: input, shape index: {}]
  %s1 = inlined_call_operand.hbm [shape: f32[8,32], index: 1, kind: input, shape index: {}]
  %s2 = inlined_call_operand.hbm [shape: f32[8,64], index: 2, kind: output, shape index: {}]
  %s3 = sld [smem:[#allocation0]]
  $region26: #{tpu_custom_call.1} parent=0
    _
  %s5 = ssub.s32 1, %s3
  %s6 = scalar_select 0, %s5, %s3
  $region1: #{tpu_custom_call.1} parent=0
    #allocation2 [shape = 'u8[4096]{0}', space=vmem, size = 0x1000, scoped, tag = 'input window, operand 0, single buffered']
    #allocation3 [shape = 's32[1]{0}', space=sflag, size = 0x4, scoped, tag = 'scoped memory for tpu_custom_call.1']
    #allocation4 [shape = 's32[1]{0}', space=sflag, size = 0x4, scoped, tag = 'scoped memory for tpu_custom_call.1']
    #allocation5 [shape = 'u8[4096]{0}', space=vmem, size = 0x1000, scoped, tag = 'input window, operand 1, single buffered']
    #allocation6 [shape = 's32[1]{0}', space=sflag, size = 0x4, scoped, tag = 'scoped memory for tpu_custom_call.1']
    #allocation7 [shape = 'u8[4096]{0}', space=vmem, size = 0x1000, scoped, tag = 'output window, operand 0, single buffered']
    %7 = vsyncpa [#allocation3], 0
    %8 = vsyncpa [#allocation6], 0
    %9 = vsyncpa [#allocation4], 0
    // Predicated region
    $region2: #{tpu_custom_call.1} parent=1 // pred_check
      _
    $region3: #{tpu_custom_call.1} parent=1 // pred_check_branch
      %11 = sbr.rel (0) target = $region5
    $region4: #{tpu_custom_call.1} parent=1 // pred_region
      %s13 = ssub.s32 128, 128
      %14 = vsyncadd [#allocation3], %s13
      %s16 = sshll.u32 [#allocation2], 4
      %s17 = int_to_ptr.vmem [resolvable:$true] %s16
      %19 = dma.hbm_to_vmem [thread:$0]  %s0, 128, %s17, [#allocation3]
    $region5: #{tpu_custom_call.1} parent=1 // pred_fallthru
      _
    // Predicated region
    $region6: #{tpu_custom_call.1} parent=1 // pred_check
      _
    $region7: #{tpu_custom_call.1} parent=1 // pred_check_branch
      %21 = sbr.rel (0) target = $region9
    $region8: #{tpu_custom_call.1} parent=1 // pred_region
      %s23 = ssub.s32 128, 128
      %24 = vsyncadd [#allocation6], %s23
      %s26 = sshll.u32 [#allocation5], 4
      %s27 = int_to_ptr.vmem [resolvable:$true] %s26
      %29 = dma.hbm_to_vmem [thread:$0]  %s1, 128, %s27, [#allocation6]
    $region9: #{tpu_custom_call.1} parent=1 // pred_fallthru
      _
    // Predicated region
    $region10: #{tpu_custom_call.1} parent=1 // pred_check
      _
    $region11: #{tpu_custom_call.1} parent=1 // pred_check_branch
      %31 = sbr.rel (0) target = $region13
    $region12: #{tpu_custom_call.1} parent=1 // pred_region
      %32 = dma.done [#allocation3], 128
    $region13: #{tpu_custom_call.1} parent=1 // pred_fallthru
      _
    // Predicated region
    $region14: #{tpu_custom_call.1} parent=1 // pred_check
      _
    $region15: #{tpu_custom_call.1} parent=1 // pred_check_branch
      %34 = sbr.rel (0) target = $region17
    $region16: #{tpu_custom_call.1} parent=1 // pred_region
      %35 = dma.done [#allocation6], 128
    $region17: #{tpu_custom_call.1} parent=1 // pred_fallthru
      _
    %v36 = vld [vmem:[#allocation5] sm:$0xff]
    %38 = vrot.lane.b32.xlu0 %v36, 32
    %v39 = vpop.permute.xlu0 %38
    %vm41 = vcmask 261120
    %v42 = vsel %vm41, %v36, %v39
    %v43 = vld [vmem:[#allocation2] sm:$0xff]
    %v44 = vadd.f32 %v43, %v42
    %vm45 = vcmask 523264
    %46 = vst.msk [vmem:[#allocation7] sm:$0xff] %vm45, %v44
    // Predicated region
    $region18: #{tpu_custom_call.1} parent=1 // pred_check
      _
    $region19: #{tpu_custom_call.1} parent=1 // pred_check_branch
      %48 = sbr.rel (0) target = $region21
    $region20: #{tpu_custom_call.1} parent=1 // pred_region
      %s50 = ssub.s32 128, 128
      %51 = vsyncadd [#allocation4], %s50
      %s53 = sshll.u32 [#allocation7], 4
      %s54 = int_to_ptr.vmem [resolvable:$true] %s53
      %56 = dma.vmem_to_hbm [thread:$0]  %s54, 128, %s2, [#allocation4]
    $region21: #{tpu_custom_call.1} parent=1 // pred_fallthru
      _
    // Predicated region
    $region22: #{tpu_custom_call.1} parent=1 // pred_check
      _
    $region23: #{tpu_custom_call.1} parent=1 // pred_check_branch
      %58 = sbr.rel (0) target = $region25
    $region24: #{tpu_custom_call.1} parent=1 // pred_region
      %59 = dma.done [#allocation4], 128
    $region25: #{tpu_custom_call.1} parent=1 // pred_fallthru
      _
    %60 = vsyncpa [#allocation3], 1
    %61 = vsyncpa [#allocation6], 1
    %62 = vsyncpa [#allocation4], 1

</llo_original>
